<compile_context>
chip_gen: v6e
topology: v6e:2x2x1
jax: 0.10.0
libtpu: 0.0.40
codegen_flags: <defaults>
</compile_context>

<pallas_src>
import math

import jax
import jax.numpy as jnp
from jax import lax
from jax.experimental import pallas as pl
from jax.experimental.pallas import tpu as pltpu

# ArcFace hyperparameters (PyTorch module defaults: s=30, margin=0.5, easy_margin=True).
S = 30.0
MARGIN = 0.5
EASY_MARGIN = True
COS_M = math.cos(MARGIN)
SIN_M = math.sin(MARGIN)
TH = math.cos(math.pi - MARGIN)
MM = math.sin(math.pi - MARGIN) * MARGIN


def _round_up(x, m):
    return (x + m - 1) // m * m


def _make_arcface_kernel(num_classes, block_c, ragged_c):
    """Kernel over grid = (batch tile i ["parallel"], class tile k ["arbitrary"])."""

    def kernel(logits_ref, labels_ref, cos_t_ref, loss_ref, m_sc, l_sc):
        k = pl.program_id(1)
        nk = pl.num_programs(1)

        @pl.when(k == 0)
        def _init():
            m_sc[...] = jnp.full_like(m_sc, -jnp.inf)
            l_sc[...] = jnp.zeros_like(l_sc)

        x = logits_ref[...].astype(jnp.float32)   # (TB, TC) cosine tile
        labels = labels_ref[...]                  # (TB, 1) int32
        cos_t = cos_t_ref[...]                    # (TB, 1) f32 target cosine

        # ArcFace margin math only on the per-row target cosine (TB, 1).
        sin_t = jnp.sqrt(jnp.clip(1.0 - cos_t * cos_t, 0.0, 1.0))
        phi = cos_t * COS_M - sin_t * SIN_M
        if EASY_MARGIN:
            phi = jnp.where(cos_t > 0.0, phi, cos_t)
        else:
            phi = jnp.where(cos_t > TH, phi, cos_t - MM)

        # Global class index of each lane; the target column uses phi, the
        # rest keep the raw cosine; everything is scaled by s.
        col = k * block_c + lax.broadcasted_iota(jnp.int32, x.shape, 1)
        is_target = col == labels
        s = jnp.where(is_target, phi, x) * S      # (TB, TC)

        def _update(s_val):
            # Online logsumexp over the class axis, per row.
            m_prev = m_sc[...]
            m_new = jnp.maximum(m_prev, jnp.max(s_val, axis=-1, keepdims=True))
            l_sc[...] = jnp.exp(m_prev - m_new) * l_sc[...] + jnp.sum(
                jnp.exp(s_val - m_new), axis=-1, keepdims=True)
            m_sc[...] = m_new

        if ragged_c:
            # Only the last class tile has padded lanes; interior tiles skip
            # the compare + select entirely at runtime.
            @pl.when(k != nk - 1)
            def _interior():
                _update(s)

            @pl.when(k == nk - 1)
            def _last():
                _update(jnp.where(col < num_classes, s, -jnp.inf))
        else:
            _update(s)

        @pl.when(k == nk - 1)
        def _finalize():
            lse = m_sc[...] + jnp.log(l_sc[...])
            loss_ref[...] = lse - phi * S         # per-sample CE loss

    return kernel


def arcface_loss(logits, labels, *, block_b=None, block_c=None):
    """ArcFace loss with 'mean' reduction.

    logits: (B, C) cosine similarities; labels: (B,) integer class ids.
    """
    B, C = logits.shape
    labels = labels.astype(jnp.int32)

    # Target cosine gathered outside the kernel: tiny (B, 1) gather.
    cos_t = jnp.take_along_axis(
        logits.astype(jnp.float32), labels[:, None], axis=1)

    # Sublane granule: 8 rows for 4-byte dtypes, 16 for 2-byte (bf16/f16).
    min_b = 8 if jnp.dtype(logits.dtype).itemsize >= 4 else 16

    if block_b is None:
        # Aim for >= 2 batch grid steps (keeps both v7x TensorCores busy);
        # cap the tile at 256 rows.
        tb = min(256, max(min_b, _round_up(pl.cdiv(B, 2), min_b)))
    else:
        tb = _round_up(block_b, min_b)
    if block_c is None:
        tc = min(_round_up(C, 128), 8192)
    else:
        tc = _round_up(block_c, 128)

    grid = (pl.cdiv(B, tb), pl.cdiv(C, tc))
    ragged_c = grid[1] * tc != C

    per_sample = pl.pallas_call(
        _make_arcface_kernel(C, tc, ragged_c),
        out_shape=jax.ShapeDtypeStruct((B, 1), jnp.float32),
        grid_spec=pltpu.PrefetchScalarGridSpec(
            num_scalar_prefetch=0,
            grid=grid,
            in_specs=[
                pl.BlockSpec((tb, tc), lambda i, k: (i, k)),
                # labels / target-cosine stay resident across the class axis.
                pl.BlockSpec((tb, 1), lambda i, k: (i, 0)),
                pl.BlockSpec((tb, 1), lambda i, k: (i, 0)),
            ],
            out_specs=pl.BlockSpec((tb, 1), lambda i, k: (i, 0)),
            scratch_shapes=[pltpu.VMEM((tb, 1), jnp.float32)] * 2,
        ),
        compiler_params=pltpu.CompilerParams(
            dimension_semantics=("parallel", "arbitrary"),
            vmem_limit_bytes=48 * 1024 * 1024,
        ),
    )(logits, labels[:, None], cos_t)

    return jnp.mean(per_sample)


def _reference(logits, labels):
    x = logits.astype(jnp.float32)
    sine = jnp.sqrt(jnp.clip(1.0 - x * x, 0.0, 1.0))
    phi = x * COS_M - sine * SIN_M
    if EASY_MARGIN:
        phi = jnp.where(x > 0.0, phi, x)
    else:
        phi = jnp.where(x > TH, phi, x - MM)
    one_hot = jax.nn.one_hot(labels, x.shape[1], dtype=jnp.float32)
    out = (one_hot * phi + (1.0 - one_hot) * x) * S
    logp = jax.nn.log_softmax(out, axis=-1)
    return -jnp.mean(jnp.sum(one_hot * logp, axis=-1))


if __name__ == "__main__":
    key = jax.random.PRNGKey(0)
    k1, k2, k3, k4 = jax.random.split(key, 4)

    # Case 1: single-tile problem (matches original toy shape).
    B1, C1 = 8, 128
    logits1 = jax.random.uniform(k1, (B1, C1), jnp.float32, -0.95, 0.95)
    labels1 = jax.random.randint(k2, (B1,), 0, C1, dtype=jnp.int32)
    loss1 = arcface_loss(logits1, labels1)
    jax.block_until_ready(loss1)
    ref1 = _reference(logits1, labels1)
    assert jnp.allclose(loss1, ref1, atol=1e-4, rtol=1e-4), (loss1, ref1)

    # Case 2: multi-tile grid with a partial batch tile and a ragged class
    # tile (exercises the online logsumexp, last-tile-only lane masking, and
    # the labels / target-cosine blocks resident across the class axis) —
    # no wrapper-side padding anywhere.
    B2, C2 = 12, 200
    logits2 = jax.random.uniform(k3, (B2, C2), jnp.float32, -0.95, 0.95)
    labels2 = jax.random.randint(k4, (B2,), 0, C2, dtype=jnp.int32)
    loss2 = arcface_loss(logits2, labels2, block_b=8, block_c=128)
    jax.block_until_ready(loss2)
    ref2 = _reference(logits2, labels2)
    assert jnp.allclose(loss2, ref2, atol=1e-4, rtol=1e-4), (loss2, ref2)

    print("KERNEL_OK")
</pallas_src>

<mosaic_0001>
module attributes {stable_mosaic.version = 11 : i64} {
  func.func @kernel(%arg0: i32, %arg1: i32, %arg2: memref<8x128xf32, #tpu.memory_space<vmem>>, %arg3: memref<8x1xi32, #tpu.memory_space<vmem>>, %arg4: memref<8x1xf32, #tpu.memory_space<vmem>>, %arg5: memref<8x1xf32, #tpu.memory_space<vmem>>, %arg6: memref<8x1xf32, #tpu.memory_space<vmem>>, %arg7: memref<8x1xf32, #tpu.memory_space<vmem>>) attributes {dimension_semantics = [#tpu.dimension_semantics<parallel>, #tpu.dimension_semantics<arbitrary>], iteration_bounds = array<i64: 1, 1>, scalar_prefetch = 0 : i64, scratch_operands = 2 : i64, tpu.core_type = #tpu.core_type<tc>, window_params = [{transform_indices = @transform_0, window_bounds = array<i64: 8, 128>}, {transform_indices = @transform_1, window_bounds = array<i64: 8, 1>}, {transform_indices = @transform_2, window_bounds = array<i64: 8, 1>}, {transform_indices = @transform_3, window_bounds = array<i64: 8, 1>}]} {
    %c0_i32 = arith.constant 0 : i32
    %0 = arith.cmpi eq, %arg1, %c0_i32 : i32
    %1 = arith.extui %0 : i1 to i32
    %c0_i32_0 = arith.constant 0 : i32
    %2 = arith.cmpi ne, %1, %c0_i32_0 : i32
    scf.if %2 {
      %cst_24 = arith.constant 0xFF800000 : f32
      %52 = vector.broadcast %cst_24 : f32 to vector<8x1xf32>
      %c0_25 = arith.constant 0 : index
      %c0_26 = arith.constant 0 : index
      %53 = vector.load %arg6[%c0_25, %c0_26] : memref<8x1xf32, #tpu.memory_space<vmem>>, vector<8x1xf32>
      tpu.vector_store %arg6[%c0_25, %c0_26], %52 {strides = array<i32>} : memref<8x1xf32, #tpu.memory_space<vmem>>, vector<8x1xf32>,
      %cst_27 = arith.constant 0.000000e+00 : f32
      %54 = vector.broadcast %cst_27 : f32 to vector<8x1xf32>
      %c0_28 = arith.constant 0 : index
      %c0_29 = arith.constant 0 : index
      %55 = vector.load %arg7[%c0_28, %c0_29] : memref<8x1xf32, #tpu.memory_space<vmem>>, vector<8x1xf32>
      tpu.vector_store %arg7[%c0_28, %c0_29], %54 {strides = array<i32>} : memref<8x1xf32, #tpu.memory_space<vmem>>, vector<8x1xf32>,
    } else {
    }
    %c0 = arith.constant 0 : index
    %c0_1 = arith.constant 0 : index
    %3 = vector.load %arg2[%c0, %c0_1] : memref<8x128xf32, #tpu.memory_space<vmem>>, vector<8x128xf32>
    %c0_2 = arith.constant 0 : index
    %c0_3 = arith.constant 0 : index
    %4 = vector.load %arg3[%c0_2, %c0_3] : memref<8x1xi32, #tpu.memory_space<vmem>>, vector<8x1xi32>
    %c0_4 = arith.constant 0 : index
    %c0_5 = arith.constant 0 : index
    %5 = vector.load %arg4[%c0_4, %c0_5] : memref<8x1xf32, #tpu.memory_space<vmem>>, vector<8x1xf32>
    %6 = arith.mulf %5, %5 : vector<8x1xf32>
    %cst = arith.constant 1.000000e+00 : f32
    %7 = vector.broadcast %cst : f32 to vector<8x1xf32>
    %8 = arith.subf %7, %6 : vector<8x1xf32>
    %cst_6 = arith.constant 0.000000e+00 : f32
    %cst_7 = arith.constant 1.000000e+00 : f32
    %9 = vector.broadcast %cst_6 : f32 to vector<8x1xf32>
    %10 = arith.maximumf %9, %8 : vector<8x1xf32>
    %11 = vector.broadcast %cst_7 : f32 to vector<8x1xf32>
    %12 = arith.minimumf %11, %10 : vector<8x1xf32>
    %13 = math.sqrt %12 : vector<8x1xf32>
    %cst_8 = arith.constant 0.87758255 : f32
    %14 = vector.broadcast %cst_8 : f32 to vector<8x1xf32>
    %15 = arith.mulf %5, %14 : vector<8x1xf32>
    %cst_9 = arith.constant 0.47942555 : f32
    %16 = vector.broadcast %cst_9 : f32 to vector<8x1xf32>
    %17 = arith.mulf %13, %16 : vector<8x1xf32>
    %18 = arith.subf %15, %17 : vector<8x1xf32>
    %cst_10 = arith.constant 0.000000e+00 : f32
    %19 = vector.broadcast %cst_10 : f32 to vector<8x1xf32>
    %20 = arith.cmpf ogt, %5, %19 : vector<8x1xf32>
    %21 = arith.select %20, %18, %5 : vector<8x1xi1>, vector<8x1xf32>
    %c128_i32 = arith.constant 128 : i32
    %22 = arith.muli %arg1, %c128_i32 : i32
    %23 = tpu.iota {dimensions = array<i32: 1>} : vector<8x128xi32>
    %24 = vector.broadcast %22 : i32 to vector<8x128xi32>
    %25 = arith.addi %24, %23 : vector<8x128xi32>
    %26 = vector.broadcast %4 : vector<8x1xi32> to vector<8x128xi32>
    %27 = arith.cmpi eq, %25, %26 : vector<8x128xi32>
    %28 = vector.shape_cast %21 : vector<8x1xf32> to vector<8x1xf32>
    %29 = vector.broadcast %28 : vector<8x1xf32> to vector<8x128xf32>
    %30 = arith.select %27, %29, %3 : vector<8x128xi1>, vector<8x128xf32>
    %cst_11 = arith.constant 3.000000e+01 : f32
    %31 = vector.broadcast %cst_11 : f32 to vector<8x128xf32>
    %32 = arith.mulf %30, %31 : vector<8x128xf32>
    %c0_12 = arith.constant 0 : index
    %c0_13 = arith.constant 0 : index
    %33 = vector.load %arg6[%c0_12, %c0_13] : memref<8x1xf32, #tpu.memory_space<vmem>>, vector<8x1xf32>
    %cst_14 = arith.constant dense<0xFF800000> : vector<8xf32>
    %34 = vector.multi_reduction <maximumf>, %32, %cst_14 [1] : vector<8x128xf32> to vector<8xf32>
    %35 = vector.shape_cast %34 : vector<8xf32> to vector<8x1xf32>
    %36 = arith.maximumf %33, %35 : vector<8x1xf32>
    %37 = arith.subf %33, %36 : vector<8x1xf32>
    %38 = math.exp %37 : vector<8x1xf32>
    %c0_15 = arith.constant 0 : index
    %c0_16 = arith.constant 0 : index
    %39 = vector.load %arg7[%c0_15, %c0_16] : memref<8x1xf32, #tpu.memory_space<vmem>>, vector<8x1xf32>
    %40 = arith.mulf %38, %39 : vector<8x1xf32>
    %41 = vector.broadcast %36 : vector<8x1xf32> to vector<8x128xf32>
    %42 = arith.subf %32, %41 : vector<8x128xf32>
    %43 = math.exp %42 : vector<8x128xf32>
    %cst_17 = arith.constant dense<0.000000e+00> : vector<8xf32>
    %44 = vector.multi_reduction <add>, %43, %cst_17 [1] : vector<8x128xf32> to vector<8xf32>
    %45 = vector.shape_cast %44 : vector<8xf32> to vector<8x1xf32>
    %46 = arith.addf %40, %45 : vector<8x1xf32>
    %c0_18 = arith.constant 0 : index
    %c0_19 = arith.constant 0 : index
    %47 = vector.load %arg7[%c0_18, %c0_19] : memref<8x1xf32, #tpu.memory_space<vmem>>, vector<8x1xf32>
    tpu.vector_store %arg7[%c0_18, %c0_19], %46 {strides = array<i32>} : memref<8x1xf32, #tpu.memory_space<vmem>>, vector<8x1xf32>,
    %c0_20 = arith.constant 0 : index
    %c0_21 = arith.constant 0 : index
    %48 = vector.load %arg6[%c0_20, %c0_21] : memref<8x1xf32, #tpu.memory_space<vmem>>, vector<8x1xf32>
    tpu.vector_store %arg6[%c0_20, %c0_21], %36 {strides = array<i32>} : memref<8x1xf32, #tpu.memory_space<vmem>>, vector<8x1xf32>,
    %c0_i32_22 = arith.constant 0 : i32
    %49 = arith.cmpi eq, %arg1, %c0_i32_22 : i32
    %50 = arith.extui %49 : i1 to i32
    %c0_i32_23 = arith.constant 0 : i32
    %51 = arith.cmpi ne, %50, %c0_i32_23 : i32
    scf.if %51 {
      %c0_24 = arith.constant 0 : index
      %c0_25 = arith.constant 0 : index
      %52 = vector.load %arg6[%c0_24, %c0_25] : memref<8x1xf32, #tpu.memory_space<vmem>>, vector<8x1xf32>
      %c0_26 = arith.constant 0 : index
      %c0_27 = arith.constant 0 : index
      %53 = vector.load %arg7[%c0_26, %c0_27] : memref<8x1xf32, #tpu.memory_space<vmem>>, vector<8x1xf32>
      %54 = math.log %53 : vector<8x1xf32>
      %55 = arith.addf %52, %54 : vector<8x1xf32>
      %cst_28 = arith.constant 3.000000e+01 : f32
      %56 = vector.broadcast %cst_28 : f32 to vector<8x1xf32>
      %57 = arith.mulf %21, %56 : vector<8x1xf32>
      %58 = arith.subf %55, %57 : vector<8x1xf32>
      %c0_29 = arith.constant 0 : index
      %c0_30 = arith.constant 0 : index
      %59 = vector.load %arg5[%c0_29, %c0_30] : memref<8x1xf32, #tpu.memory_space<vmem>>, vector<8x1xf32>
      tpu.vector_store %arg5[%c0_29, %c0_30], %58 {strides = array<i32>} : memref<8x1xf32, #tpu.memory_space<vmem>>, vector<8x1xf32>,
    } else {
    }
    return
  }
  func.func @transform_0(%arg0: i32, %arg1: i32) -> (i32, i32) {
    %c0_i32 = arith.constant 0 : i32
    return %arg0, %arg1 : i32, i32
  }
  func.func @transform_1(%arg0: i32, %arg1: i32) -> (i32, i32) {
    %c0_i32 = arith.constant 0 : i32
    %c0_i32_0 = arith.constant 0 : i32
    return %arg0, %c0_i32 : i32, i32
  }
  func.func @transform_2(%arg0: i32, %arg1: i32) -> (i32, i32) {
    %c0_i32 = arith.constant 0 : i32
    %c0_i32_0 = arith.constant 0 : i32
    return %arg0, %c0_i32 : i32, i32
  }
  func.func @transform_3(%arg0: i32, %arg1: i32) -> (i32, i32) {
    %c0_i32 = arith.constant 0 : i32
    %c0_i32_0 = arith.constant 0 : i32
    return %arg0, %c0_i32 : i32, i32
  }
}

</mosaic_0001>

<llo_original>
// kernel: tpu_custom_call.1
$region0: #{tpu_custom_call.1}
  #allocation0 [shape = 'u32[]', space=smem, size = 0x4, offset = 0x4, fixed_abs, tag = 'smem constant byte address 0x4 - core index']
  #allocation1 [shape = 'u32[144,128]{1,0:T(1,128)}', space=vmem, size = 0x12000, scoped, tag = 'internal scratch']
  #allocation2 [shape = 'f32[8,1]{1,0:T(8,128)}', space=vmem, size = 0x1000, scoped, tag = 'scratch operand']
  #allocation3 [shape = 'f32[8,1]{1,0:T(8,128)}', space=vmem, size = 0x1000, scoped, tag = 'scratch operand']
  %s0 = inlined_call_operand.vmem [shape: f32[8,128], index: 0, kind: input, shape index: {}]
  %s1 = inlined_call_operand.vmem [shape: s32[8,1], index: 1, kind: input, shape index: {}]
  %s2 = inlined_call_operand.vmem [shape: f32[8,1], index: 2, kind: input, shape index: {}]
  %s3 = inlined_call_operand.vmem [shape: f32[8,1], index: 3, kind: output, shape index: {}]
  %s4 = sld [smem:[#allocation0]]
  $region30: #{tpu_custom_call.1} parent=0
    _
  %s6 = ssub.s32 1, %s4
  %s7 = scalar_select 0, %s6, %s4
  // Predicated region
  $region2: #{tpu_custom_call.1} parent=0 // pred_check
    _
  $region3: #{tpu_custom_call.1} parent=0 // pred_check_branch
    %9 = sbr.rel (0) target = $region5
  $region4: #{tpu_custom_call.1} parent=0 // pred_region
    _
  $region5: #{tpu_custom_call.1} parent=0 // pred_fallthru
    _
  // Predicated region
  $region6: #{tpu_custom_call.1} parent=0 // pred_check
    _
  $region7: #{tpu_custom_call.1} parent=0 // pred_check_branch
    %11 = sbr.rel (0) target = $region9
  $region8: #{tpu_custom_call.1} parent=0 // pred_region
    _
  $region9: #{tpu_custom_call.1} parent=0 // pred_fallthru
    _
  // Predicated region
  $region10: #{tpu_custom_call.1} parent=0 // pred_check
    _
  $region11: #{tpu_custom_call.1} parent=0 // pred_check_branch
    %13 = sbr.rel (0) target = $region13
  $region12: #{tpu_custom_call.1} parent=0 // pred_region
    _
  $region13: #{tpu_custom_call.1} parent=0 // pred_fallthru
    _
  %p14 = scmp.eq.s32.totalorder 0, 0
  // Predicated region
  $region14: #{tpu_custom_call.1} parent=0 // pred_check
    %p15 = pneg %p14
  $region15: #{tpu_custom_call.1} parent=0 // pred_check_branch
    %17 = sbr.rel (%p15) target = $region17
  $region16: #{tpu_custom_call.1} parent=0 // pred_region
    %vm18 = vcmask 7168
    %19 = vst.msk [vmem:[#allocation2] sm:$0xff] %vm18, -inf
    %20 = vst.msk [vmem:[#allocation3] sm:$0xff] %vm18, 0.0
  $region17: #{tpu_custom_call.1} parent=0 // pred_fallthru
    _
  %v21 = vld [vmem:[%s0] sm:$0xff]
  %v22 = vld [vmem:[%s1] sm:$0xff]
  %v23 = vld [vmem:[%s2] sm:$0xff]
  %v24 = vmul.f32 %v23, %v23
  %v25 = vsub.f32 1.0, %v24
  %v26 = vmax.f32 %v25, 0.0
  %v27 = vmin.f32 %v26, 1.0
  %v28 = vrsqrt.pop %v27
  %v29 = vmul.f32 %v27, %v28
  %vm30 = vcmp.eq.f32.partialorder %v27, inf
  %v31 = vsel %vm30, %v27, %v29
  %vm32 = vcmp.eq.f32.partialorder %v27, 0.0
  %v33 = vand.u32 %v27, 2147483648
  %v34 = vsel %vm32, %v33, %v31
  %v35 = vmul.f32 %v23, 0.87758255
  %v36 = vmul.f32 %v34, 0.47942555
  %v37 = vsub.f32 %v35, %v36
  %vm38 = vcmp.gt.f32.partialorder %v23, 0.0
  %v39 = vsel %vm38, %v37, %v23
  %s40 = smul.u32 0, 128
  %v41 = vlaneseq
  %v42 = vand.u32 %v41, 127
  %v43 = vstv %s40
  %v44 = vadd.s32 %v43, %v42
  %45 = vset.pattern.permute.xlu0 0
  %46 = vperm.xlu0 %45, %v22
  %v47 = vpop.permute.xlu0 %46
  %vm48 = vcmp.eq.s32.totalorder %v44, %v47
  %50 = vset.pattern.permute.xlu0 0
  %51 = vperm.xlu0 %50, %v39
  %v52 = vpop.permute.xlu0 %51
  %v54 = vsel %vm48, %v52, %v21
  %v55 = vmul.f32 %v54, 30.0
  %v56 = vld [vmem:[#allocation2] sm:$0xff]
  %57 = vmax.xlane.f32.xlu0 %v55
  %v58 = vpop.xlane.xlu0 %57
  %v59 = vmax.f32 %v56, %v58
  %v60 = vsub.f32 %v56, %v59
  %v61 = vmul.f32 %v60, 1.442695
  %v62 = vpow.pop %v61
  %v63 = vld [vmem:[#allocation3] sm:$0xff]
  %v64 = vmul.f32 %v62, %v63
  %66 = vset.pattern.permute.xlu0 0
  %67 = vperm.xlu0 %66, %v59
  %v68 = vpop.permute.xlu0 %67
  %v70 = vsub.f32 %v55, %v68
  %v71 = vmul.f32 %v70, 1.442695
  %v72 = vpow.pop %v71
  %73 = vadd.xlane.f32.xlu0 %v72
  %v74 = vpop.xlane.xlu0 %73
  %v75 = vadd.f32 %v64, %v74
  %vm76 = vcmask 7168
  %77 = vst.msk [vmem:[#allocation3] sm:$0xff] %vm76, %v75
  %78 = vst.msk [vmem:[#allocation2] sm:$0xff] %vm76, %v59
  // Predicated region
  $region18: #{tpu_custom_call.1} parent=0 // pred_check
    %p79 = pneg %p14
  $region19: #{tpu_custom_call.1} parent=0 // pred_check_branch
    %81 = sbr.rel (%p79) target = $region21
  $region20: #{tpu_custom_call.1} parent=0 // pred_region
    %v82 = vld [vmem:[#allocation2] sm:$0xff]
    %v83 = vld [vmem:[#allocation3] sm:$0xff]
    %v84 = vlog2.pop %v83
    %v85 = vmul.f32 %v84, 0.6931472
    %v86 = vadd.f32 %v82, %v85
    %v87 = vmul.f32 %v39, 30.0
    %v88 = vsub.f32 %v86, %v87
    %89 = vst.msk [vmem:[%s3] sm:$0xff] %vm76, %v88
  $region21: #{tpu_custom_call.1} parent=0 // pred_fallthru
    _
  // Predicated region
  $region22: #{tpu_custom_call.1} parent=0 // pred_check
    _
  $region23: #{tpu_custom_call.1} parent=0 // pred_check_branch
    %91 = sbr.rel (0) target = $region25
  $region24: #{tpu_custom_call.1} parent=0 // pred_region
    _
  $region25: #{tpu_custom_call.1} parent=0 // pred_fallthru
    _
  // Predicated region
  $region26: #{tpu_custom_call.1} parent=0 // pred_check
    _
  $region27: #{tpu_custom_call.1} parent=0 // pred_check_branch
    %93 = sbr.rel (0) target = $region29
  $region28: #{tpu_custom_call.1} parent=0 // pred_region
    _
  $region29: #{tpu_custom_call.1} parent=0 // pred_fallthru
    _

</llo_original>
